<compile_context>
chip_gen: v5e
topology: v5e:2x2
jax: 0.10.0
libtpu: 0.0.40
codegen_flags: <defaults>
</compile_context>

<pallas_src>
import functools

import jax
import jax.numpy as jnp
from jax import lax
from jax.experimental import pallas as pl
from jax.experimental.pallas import tpu as pltpu


def _mlp_kernel_t(xt_ref, p1_ref, p2_ref, out_ref, *, d_in, h, d_out):
    """Two-layer sigmoid MLP in the transposed (feature, batch) domain.

    xt_ref : (d_in, tile_n)   -- x^T tile, batch on the lane axis
    p1_ref : (h, d_in + 1)    -- [W1 | b1], PyTorch W1 layout (no transpose)
    p2_ref : (d_out, h + 1)   -- [W2 | b2], PyTorch W2 layout (no transpose)
    out_ref: (d_out, tile_n)  -- yhat^T tile, lane-dense store
    """
    xt = xt_ref[...]                      # (d_in, tile_n)

    p1 = p1_ref[...]
    w1 = p1[:, :d_in]                     # (h, d_in)
    b1 = p1[:, d_in:d_in + 1]             # (h, 1)

    if d_in == 1:
        # K=1 contraction: outer-product broadcast on the VPU, skip the MXU.
        h_pre = w1 * xt + b1              # (h,1)*(1,tile_n) + (h,1)
    else:
        h_pre = lax.dot_general(
            w1, xt, (((1,), (0,)), ((), ())),
            preferred_element_type=jnp.float32) + b1
    h_act = jax.nn.sigmoid(h_pre)         # (h, tile_n)

    p2 = p2_ref[...]
    w2 = p2[:, :h]                        # (d_out, h)
    b2 = p2[:, h:h + 1]                   # (d_out, 1)
    y_pre = lax.dot_general(
        w2, h_act, (((1,), (0,)), ((), ())),
        preferred_element_type=jnp.float32) + b2
    out_ref[...] = jax.nn.sigmoid(y_pre).astype(out_ref.dtype)


def _pick_tile_n(n):
    # Large lane-dense tiles when possible (per-grid-step overhead ~0.35 us);
    # otherwise a single block covering the whole (small) batch.
    for t in (2048, 1024, 512, 256, 128):
        if n % t == 0:
            return t
    return n


def net_forward(x, w1, b1, w2, b2):
    """Pallas equivalent of Net.forward.

    x  : (N, D_in) float32
    w1 : (H, D_in), b1: (H,)       -- nn.Linear(D_in, H)
    w2 : (D_out, H), b2: (D_out,)  -- nn.Linear(H, D_out)
    returns (N, D_out) float32
    """
    n, d_in = x.shape
    h = w1.shape[0]
    d_out = w2.shape[0]

    # Wrapper-side layout plumbing (free for the kernel):
    #  * batch -> lane axis, * weights kept in PyTorch layout,
    #  * per-layer [W|b] packing -> 3 input DMAs instead of 5.
    xt = x.astype(jnp.float32).T                                   # (D_in, N)
    p1 = jnp.concatenate(
        [w1.astype(jnp.float32), b1.astype(jnp.float32).reshape(h, 1)], axis=1)
    p2 = jnp.concatenate(
        [w2.astype(jnp.float32), b2.astype(jnp.float32).reshape(d_out, 1)],
        axis=1)

    tile_n = _pick_tile_n(n)       # always divides n
    grid = (n // tile_n,)

    kernel = functools.partial(_mlp_kernel_t, d_in=d_in, h=h, d_out=d_out)

    yt = pl.pallas_call(
        kernel,
        out_shape=jax.ShapeDtypeStruct((d_out, n), jnp.float32),
        grid_spec=pltpu.PrefetchScalarGridSpec(
            num_scalar_prefetch=0,
            grid=grid,
            in_specs=[
                pl.BlockSpec((d_in, tile_n), lambda i: (0, i)),
                pl.BlockSpec((h, d_in + 1), lambda i: (0, 0)),   # resident W1|b1
                pl.BlockSpec((d_out, h + 1), lambda i: (0, 0)),  # resident W2|b2
            ],
            out_specs=pl.BlockSpec((d_out, tile_n), lambda i: (0, i)),
        ),
        compiler_params=pltpu.CompilerParams(
            dimension_semantics=("parallel",),   # rows split across TCs on v7x
        ),
    )(xt, p1, p2)

    return yt.T                                                    # (N, D_out)


def _init_params(key, d_in, h, d_out):
    """Deterministic nn.Linear-style init (uniform(-1/sqrt(fan_in), 1/sqrt(fan_in)))."""
    k1, k2, k3, k4 = jax.random.split(key, 4)
    bound1 = 1.0 / jnp.sqrt(jnp.float32(d_in))
    bound2 = 1.0 / jnp.sqrt(jnp.float32(h))
    w1 = jax.random.uniform(k1, (h, d_in), jnp.float32, -bound1, bound1)
    b1 = jax.random.uniform(k2, (h,), jnp.float32, -bound1, bound1)
    w2 = jax.random.uniform(k3, (d_out, h), jnp.float32, -bound2, bound2)
    b2 = jax.random.uniform(k4, (d_out,), jnp.float32, -bound2, bound2)
    return w1, b1, w2, b2


if __name__ == "__main__":
    # Small shapes consistent with the 1D multi-node NN chapter:
    # D_in=1 scalar input feature, H hidden nodes, D_out=1 output.
    N, D_IN, H, D_OUT = 8, 1, 32, 1

    key = jax.random.PRNGKey(0)
    kx, kp = jax.random.split(key)
    x = jax.random.normal(kx, (N, D_IN), jnp.float32)
    w1, b1, w2, b2 = _init_params(kp, D_IN, H, D_OUT)

    yhat = net_forward(x, w1, b1, w2, b2)
    yhat = jax.block_until_ready(yhat)

    # Cross-check against a pure-JAX reference of the same math.
    ref = jax.nn.sigmoid(jax.nn.sigmoid(x @ w1.T + b1) @ w2.T + b2)
    assert yhat.shape == (N, D_OUT)
    assert jnp.allclose(yhat, ref, atol=1e-5, rtol=1e-5)

    print("KERNEL_OK")
</pallas_src>

<mosaic_0001>
module attributes {stable_mosaic.version = 11 : i64} {
  func.func @_mlp_kernel_t(%arg0: i32, %arg1: memref<1x8xf32, #tpu.memory_space<vmem>>, %arg2: memref<32x2xf32, #tpu.memory_space<vmem>>, %arg3: memref<1x33xf32, #tpu.memory_space<vmem>>, %arg4: memref<1x8xf32, #tpu.memory_space<vmem>>) attributes {dimension_semantics = [#tpu.dimension_semantics<parallel>], iteration_bounds = array<i64: 1>, scalar_prefetch = 0 : i64, scratch_operands = 0 : i64, tpu.core_type = #tpu.core_type<tc>, window_params = [{transform_indices = @transform_0, window_bounds = array<i64: 1, 8>}, {pipeline_mode = #tpu.pipeline_mode<synchronous>, transform_indices = @transform_1, window_bounds = array<i64: 32, 2>}, {pipeline_mode = #tpu.pipeline_mode<synchronous>, transform_indices = @transform_2, window_bounds = array<i64: 1, 33>}, {transform_indices = @transform_3, window_bounds = array<i64: 1, 8>}]} {
    %c0 = arith.constant 0 : index
    %c0_0 = arith.constant 0 : index
    %0 = vector.load %arg1[%c0, %c0_0] : memref<1x8xf32, #tpu.memory_space<vmem>>, vector<1x8xf32>
    %c0_1 = arith.constant 0 : index
    %c0_2 = arith.constant 0 : index
    %1 = vector.load %arg2[%c0_1, %c0_2] : memref<32x2xf32, #tpu.memory_space<vmem>>, vector<32x2xf32>
    %2 = vector.extract_strided_slice %1 {offsets = [0, 0], sizes = [32, 1], strides = [1, 1]} : vector<32x2xf32> to vector<32x1xf32>
    %3 = vector.extract_strided_slice %1 {offsets = [0, 1], sizes = [32, 1], strides = [1, 1]} : vector<32x2xf32> to vector<32x1xf32>
    %4 = vector.broadcast %2 : vector<32x1xf32> to vector<32x8xf32>
    %5 = vector.broadcast %0 : vector<1x8xf32> to vector<32x8xf32>
    %6 = arith.mulf %4, %5 : vector<32x8xf32>
    %7 = vector.broadcast %3 : vector<32x1xf32> to vector<32x8xf32>
    %8 = arith.addf %6, %7 : vector<32x8xf32>
    %9 = arith.negf %8 : vector<32x8xf32>
    %10 = math.exp %9 : vector<32x8xf32>
    %cst = arith.constant 1.000000e+00 : f32
    %11 = vector.broadcast %cst : f32 to vector<32x8xf32>
    %12 = arith.addf %11, %10 : vector<32x8xf32>
    %13 = arith.divf %11, %12 : vector<32x8xf32>
    %c0_3 = arith.constant 0 : index
    %c0_4 = arith.constant 0 : index
    %14 = vector.load %arg3[%c0_3, %c0_4] : memref<1x33xf32, #tpu.memory_space<vmem>>, vector<1x33xf32>
    %15 = vector.extract_strided_slice %14 {offsets = [0, 0], sizes = [1, 32], strides = [1, 1]} : vector<1x33xf32> to vector<1x32xf32>
    %16 = vector.extract_strided_slice %14 {offsets = [0, 32], sizes = [1, 1], strides = [1, 1]} : vector<1x33xf32> to vector<1x1xf32>
    %cst_5 = arith.constant dense<0.000000e+00> : vector<1x8xf32>
    %17 = tpu.matmul %15, %13, %cst_5 {dimension_numbers = #tpu.dot_dimension_numbers<[1], [0], [0], [1], [0, 0, 1, 1], [], []>} : vector<1x32xf32>, vector<32x8xf32>, vector<1x8xf32> -> vector<1x8xf32>
    %18 = vector.broadcast %16 : vector<1x1xf32> to vector<1x8xf32>
    %19 = arith.addf %17, %18 : vector<1x8xf32>
    %20 = arith.negf %19 : vector<1x8xf32>
    %21 = math.exp %20 : vector<1x8xf32>
    %cst_6 = arith.constant 1.000000e+00 : f32
    %22 = vector.broadcast %cst_6 : f32 to vector<1x8xf32>
    %23 = arith.addf %22, %21 : vector<1x8xf32>
    %24 = arith.divf %22, %23 : vector<1x8xf32>
    %c0_7 = arith.constant 0 : index
    %c0_8 = arith.constant 0 : index
    %25 = vector.load %arg4[%c0_7, %c0_8] : memref<1x8xf32, #tpu.memory_space<vmem>>, vector<1x8xf32>
    tpu.vector_store %arg4[%c0_7, %c0_8], %24 {strides = array<i32>} : memref<1x8xf32, #tpu.memory_space<vmem>>, vector<1x8xf32>,
    return
  }
  func.func @transform_0(%arg0: i32) -> (i32, i32) {
    %c0_i32 = arith.constant 0 : i32
    %c0_i32_0 = arith.constant 0 : i32
    return %c0_i32, %arg0 : i32, i32
  }
  func.func @transform_1(%arg0: i32) -> (i32, i32) {
    %c0_i32 = arith.constant 0 : i32
    %c0_i32_0 = arith.constant 0 : i32
    %c0_i32_1 = arith.constant 0 : i32
    return %c0_i32, %c0_i32_0 : i32, i32
  }
  func.func @transform_2(%arg0: i32) -> (i32, i32) {
    %c0_i32 = arith.constant 0 : i32
    %c0_i32_0 = arith.constant 0 : i32
    %c0_i32_1 = arith.constant 0 : i32
    return %c0_i32, %c0_i32_0 : i32, i32
  }
  func.func @transform_3(%arg0: i32) -> (i32, i32) {
    %c0_i32 = arith.constant 0 : i32
    %c0_i32_0 = arith.constant 0 : i32
    return %c0_i32, %arg0 : i32, i32
  }
}

</mosaic_0001>

<llo_original>
// kernel: tpu_custom_call.1
$region0: #{tpu_custom_call.1}
  #allocation0 [shape = 'u32[]', space=smem, size = 0x4, offset = 0x4, fixed_abs, tag = 'smem constant byte address 0x4 - core index']
  #allocation1 [shape = 'u32[72,128]{1,0:T(1,128)}', space=vmem, size = 0x9000, scoped, tag = 'internal scratch']
  %s0 = inlined_call_operand.vmem [shape: f32[1,8], index: 0, kind: input, shape index: {}]
  %s1 = inlined_call_operand.vmem [shape: f32[32,2], index: 1, kind: input, shape index: {}]
  %s2 = inlined_call_operand.vmem [shape: f32[1,33], index: 2, kind: input, shape index: {}]
  %s3 = inlined_call_operand.hbm [shape: f32[1,8], index: 3, kind: output, shape index: {}]
  %s4 = sld [smem:[#allocation0]]
  $region22: #{tpu_custom_call.1} parent=0
    _
  %s6 = ssub.s32 1, %s4
  %s7 = scalar_select 0, %s6, %s4
  $region1: #{tpu_custom_call.1} parent=0
    #allocation2 [shape = 'u8[512]{0}', space=vmem, size = 0x400, scoped, tag = 'output window, operand 0, single buffered']
    #allocation3 [shape = 's32[1]{0}', space=sflag, size = 0x4, scoped, tag = 'scoped memory for tpu_custom_call.1']
    %8 = vsyncpa [#allocation3], 0
    // Predicated region
    $region2: #{tpu_custom_call.1} parent=1 // pred_check
      _
    $region3: #{tpu_custom_call.1} parent=1 // pred_check_branch
      %10 = sbr.rel (0) target = $region5
    $region4: #{tpu_custom_call.1} parent=1 // pred_region
      _
    $region5: #{tpu_custom_call.1} parent=1 // pred_fallthru
      _
    // Predicated region
    $region6: #{tpu_custom_call.1} parent=1 // pred_check
      _
    $region7: #{tpu_custom_call.1} parent=1 // pred_check_branch
      %12 = sbr.rel (0) target = $region9
    $region8: #{tpu_custom_call.1} parent=1 // pred_region
      _
    $region9: #{tpu_custom_call.1} parent=1 // pred_fallthru
      _
    // Predicated region
    $region10: #{tpu_custom_call.1} parent=1 // pred_check
      _
    $region11: #{tpu_custom_call.1} parent=1 // pred_check_branch
      %14 = sbr.rel (0) target = $region13
    $region12: #{tpu_custom_call.1} parent=1 // pred_region
      _
    $region13: #{tpu_custom_call.1} parent=1 // pred_fallthru
      _
    %v15 = vld [vmem:[%s0] sm:$0x1]
    %v16 = vld [vmem:[%s1] sm:$0xff]
    %v17 = vld [vmem:[%s1 + $0x8] sm:$0xff]
    %v18 = vld [vmem:[%s1 + $0x10] sm:$0xff]
    %v19 = vld [vmem:[%s1 + $0x18] sm:$0xff]
    %21 = vset.pattern.permute.xlu0 0
    %22 = vperm.xlu0 %21, %v16
    %v23 = vpop.permute.xlu0 %22
    %26 = vset.pattern.permute.xlu0 0
    %27 = vperm.xlu0 %26, %v17
    %v28 = vpop.permute.xlu0 %27
    %31 = vset.pattern.permute.xlu0 0
    %32 = vperm.xlu0 %31, %v18
    %v33 = vpop.permute.xlu0 %32
    %36 = vset.pattern.permute.xlu0 0
    %37 = vperm.xlu0 %36, %v19
    %v38 = vpop.permute.xlu0 %37
    %v41 = vperm.slane %v15, 0
    %v43 = vmul.f32 %v23, %v41
    %v44 = vmul.f32 %v28, %v41
    %v45 = vmul.f32 %v33, %v41
    %v46 = vmul.f32 %v38, %v41
    %47 = vset.pattern.permute.xlu0 1
    %48 = vperm.xlu0 %47, %v16
    %v49 = vpop.permute.xlu0 %48
    %51 = vset.pattern.permute.xlu0 1
    %52 = vperm.xlu0 %51, %v17
    %v53 = vpop.permute.xlu0 %52
    %55 = vset.pattern.permute.xlu0 1
    %56 = vperm.xlu0 %55, %v18
    %v57 = vpop.permute.xlu0 %56
    %59 = vset.pattern.permute.xlu0 1
    %60 = vperm.xlu0 %59, %v19
    %v61 = vpop.permute.xlu0 %60
    %v63 = vadd.f32 %v43, %v49
    %v64 = vadd.f32 %v44, %v53
    %v65 = vadd.f32 %v45, %v57
    %v66 = vadd.f32 %v46, %v61
    %v67 = vxor.u32 %v63, 2147483648
    %v68 = vxor.u32 %v64, 2147483648
    %v69 = vxor.u32 %v65, 2147483648
    %v70 = vxor.u32 %v66, 2147483648
    %v71 = vmul.f32 %v67, 1.442695
    %v72 = vpow.pop %v71
    %v73 = vmul.f32 %v68, 1.442695
    %v74 = vpow.pop %v73
    %v75 = vmul.f32 %v69, 1.442695
    %v76 = vpow.pop %v75
    %v77 = vmul.f32 %v70, 1.442695
    %v78 = vpow.pop %v77
    %v79 = vadd.f32 %v72, 1.0
    %v80 = vadd.f32 %v74, 1.0
    %v81 = vadd.f32 %v76, 1.0
    %v82 = vadd.f32 %v78, 1.0
    %v83 = vrcp.pop %v79
    %v84 = vmul.f32 %v79, %v83
    %v85 = vsub.f32 1.0, %v84
    %v86 = vmul.f32 %v83, %v85
    %v87 = vadd.f32 %v83, %v86
    %vm88 = vweird.f32 %v79
    %vm89 = vweird.f32 %v83
    %vm90 = vmor %vm88, %vm89
    %v91 = vsel %vm90, %v83, %v87
    %v92 = vand.u32 2147483647, %v79
    %vm93 = vcmp.eq.f32.partialorder %v92, 8.507059e+37
    %v94 = vand.u32 %v79, 2147483648
    %v95 = vor.u32 1.1754944e-38, %v94
    %v96 = vsel %vm93, %v95, %v91
    %v97 = vmul.f32 1.0, %v96
    %v98 = vrcp.pop %v80
    %v99 = vmul.f32 %v80, %v98
    %v100 = vsub.f32 1.0, %v99
    %v101 = vmul.f32 %v98, %v100
    %v102 = vadd.f32 %v98, %v101
    %vm103 = vweird.f32 %v80
    %vm104 = vweird.f32 %v98
    %vm105 = vmor %vm103, %vm104
    %v106 = vsel %vm105, %v98, %v102
    %v107 = vand.u32 2147483647, %v80
    %vm108 = vcmp.eq.f32.partialorder %v107, 8.507059e+37
    %v109 = vand.u32 %v80, 2147483648
    %v110 = vor.u32 1.1754944e-38, %v109
    %v111 = vsel %vm108, %v110, %v106
    %v112 = vmul.f32 1.0, %v111
    %v113 = vrcp.pop %v81
    %v114 = vmul.f32 %v81, %v113
    %v115 = vsub.f32 1.0, %v114
    %v116 = vmul.f32 %v113, %v115
    %v117 = vadd.f32 %v113, %v116
    %vm118 = vweird.f32 %v81
    %vm119 = vweird.f32 %v113
    %vm120 = vmor %vm118, %vm119
    %v121 = vsel %vm120, %v113, %v117
    %v122 = vand.u32 2147483647, %v81
    %vm123 = vcmp.eq.f32.partialorder %v122, 8.507059e+37
    %v124 = vand.u32 %v81, 2147483648
    %v125 = vor.u32 1.1754944e-38, %v124
    %v126 = vsel %vm123, %v125, %v121
    %v127 = vmul.f32 1.0, %v126
    %v128 = vrcp.pop %v82
    %v129 = vmul.f32 %v82, %v128
    %v130 = vsub.f32 1.0, %v129
    %v131 = vmul.f32 %v128, %v130
    %v132 = vadd.f32 %v128, %v131
    %vm133 = vweird.f32 %v82
    %vm134 = vweird.f32 %v128
    %vm135 = vmor %vm133, %vm134
    %v136 = vsel %vm135, %v128, %v132
    %v137 = vand.u32 2147483647, %v82
    %vm138 = vcmp.eq.f32.partialorder %v137, 8.507059e+37
    %v139 = vand.u32 %v82, 2147483648
    %v140 = vor.u32 1.1754944e-38, %v139
    %v141 = vsel %vm138, %v140, %v136
    %v142 = vmul.f32 1.0, %v141
    %v143 = vld [vmem:[%s2] sm:$0x1]
    %145 = vset.pattern.permute.xlu0 32
    %146 = vperm.xlu0 %145, %v143
    %v147 = vpop.permute.xlu0 %146
    %v149 = vperm.slane %v147, 0
    %vm150 = vcmask 261120
    %v151 = vsel %vm150, %v143, 0
    %153 = vmatpush.msra.mxu0 0.0
    %154 = vmatpush.msra.mxu0 0.0
    %155 = vmatpush.msra.mxu0 0.0
    %156 = vmatpush.msra.mxu0 0.0
    %157 = vmatpush.msra.mxu0 0.0
    %158 = vmatpush.msra.mxu0 0.0
    %159 = vmatpush.msra.mxu0 0.0
    %160 = vmatpush.msra.mxu0 0.0
    %161 = vmatpush.msra.mxu0 0.0
    %162 = vmatpush.msra.mxu0 0.0
    %163 = vmatpush.msra.mxu0 0.0
    %164 = vmatpush.msra.mxu0 0.0
    %165 = vmatpush.msra.mxu0 %v142
    %166 = vmatpush.msra.mxu0 %v127
    %167 = vmatpush.msra.mxu0 %v112
    %168 = vmatpush.msra.mxu0 %v97
    %169 = vmatmul.f32.gmra.mxu0 %v151
    %v170 = vpop.f32.mrf.mxu0
    %v171 = vadd.f32 %v149, %v170
    %172 = vdwg.mxu0
    %v173 = vxor.u32 %v171, 2147483648
    %v174 = vmul.f32 %v173, 1.442695
    %v175 = vpow.pop %v174
    %v176 = vadd.f32 %v175, 1.0
    %v177 = vrcp.pop %v176
    %v178 = vmul.f32 %v176, %v177
    %v179 = vsub.f32 1.0, %v178
    %v180 = vmul.f32 %v177, %v179
    %v181 = vadd.f32 %v177, %v180
    %vm182 = vweird.f32 %v176
    %vm183 = vweird.f32 %v177
    %vm184 = vmor %vm182, %vm183
    %v185 = vsel %vm184, %v177, %v181
    %v186 = vand.u32 2147483647, %v176
    %vm187 = vcmp.eq.f32.partialorder %v186, 8.507059e+37
    %v188 = vand.u32 %v176, 2147483648
    %v189 = vor.u32 1.1754944e-38, %v188
    %v190 = vsel %vm187, %v189, %v185
    %v191 = vmul.f32 1.0, %v190
    %vm192 = vcmask 57344
    %193 = vst.msk [vmem:[#allocation2] sm:$0x1] %vm192, %v191
    // Predicated region
    $region14: #{tpu_custom_call.1} parent=1 // pred_check
      _
    $region15: #{tpu_custom_call.1} parent=1 // pred_check_branch
      %195 = sbr.rel (0) target = $region17
    $region16: #{tpu_custom_call.1} parent=1 // pred_region
      %197 = vsyncadd [#allocation3], 0
      %s199 = sshll.u32 [#allocation2], 4
      %s200 = int_to_ptr.vmem [resolvable:$true] %s199
      %s201 = sshll.u32 %s3, 4
      %s202 = int_to_ptr.hbm [resolvable:$true] %s201
      %204 = dma.vmem_to_hbm [thread:$0]  %s200, 16, %s202, [#allocation3]
    $region17: #{tpu_custom_call.1} parent=1 // pred_fallthru
      _
    // Predicated region
    $region18: #{tpu_custom_call.1} parent=1 // pred_check
      _
    $region19: #{tpu_custom_call.1} parent=1 // pred_check_branch
      %206 = sbr.rel (0) target = $region21
    $region20: #{tpu_custom_call.1} parent=1 // pred_region
      %208 = dma.done [#allocation3], 16
    $region21: #{tpu_custom_call.1} parent=1 // pred_fallthru
      _
    %209 = vsyncpa [#allocation3], 1

</llo_original>
